<compile_context>
chip_gen: v7x
topology: tpu7x:2x2x1
jax: 0.10.0
libtpu: 0.0.40
codegen_flags: <defaults>
</compile_context>

<pallas_src>
import functools

import jax
import jax.numpy as jnp
from jax.experimental import pallas as pl
from jax.experimental.pallas import tpu as pltpu

EPSILON = 1e-40
# TODO(synk): PyTorch clamps at 1e-40, a float32 denormal; the TPU VPU flushes
# denormals to zero (=> -log(0) = +inf), so the effective floor is the smallest
# normal float32 (~1.18e-38). Differs from the CPU reference only for inputs
# below ~1.2e-38.
_CLAMP_LO = max(EPSILON, float(jnp.finfo(jnp.float32).tiny))

_LANE = 128


def _device_kind():
    try:
        return jax.devices()[0].device_kind.lower()
    except Exception:  # defensive: detection failure only affects tuning, not correctness
        return ""


def _tensorcore_count(kind):
    # v5e / v6e expose one TensorCore per chip; v4/v5p (megacore) and v7x shard
    # "parallel" grid axes across two TensorCores.
    single_tc = ("v5 lite", "v5lite", "v5e", "v6 lite", "v6lite", "v6e")
    if any(tag in kind for tag in single_tc):
        return 1
    return 2


def _target_block_bytes(kind):
    # v5e default scoped VMEM is 16 MiB -> 2 MiB blocks (4 MiB double-buffered).
    # v6e / v7x default to 32 MiB scoped VMEM -> 4 MiB blocks.
    if any(tag in kind for tag in ("v5 lite", "v5lite", "v5e")):
        return 2 * 1024 * 1024
    return 4 * 1024 * 1024


def _ceil_div(a, b):
    return -(-a // b)


def _gloss_kernel(x_ref, out_ref, *, rows, block_rows, acc_rows, inner_steps,
                  total_blocks, num_cores):
    """Accumulate sum(log(clamp(x, lo, 1))) of this core's row blocks into out_ref."""
    c = pl.program_id(0)           # TensorCore / "parallel" axis
    i = pl.program_id(1)           # row-block / "arbitrary" axis
    blk = c * inner_steps + i      # global block id

    @pl.when(i == 0)
    def _init():
        out_ref[...] = jnp.zeros_like(out_ref)

    # Static (Python-level) facts about the tiling.
    valid_rows_last = rows - (total_blocks - 1) * block_rows
    has_partial_last_block = valid_rows_last != block_rows
    has_overhang_steps = num_cores * inner_steps != total_blocks

    def _add(contrib):
        if block_rows == acc_rows:
            out_ref[...] += contrib
        else:
            # Tile-aligned reshape + leading-axis sum: pure vreg add chain, no
            # full-block accumulator load/store per input vreg.
            out_ref[...] += contrib.reshape(
                block_rows // acc_rows, acc_rows, _LANE).sum(axis=0)

    def _compute():
        x = x_ref[...].astype(jnp.float32)
        logv = jnp.log(jnp.clip(x, _CLAMP_LO, 1.0))
        if not has_partial_last_block:
            _add(logv)                      # steady state: no masking at all
        else:
            @pl.when(blk != total_blocks - 1)
            def _full():
                _add(logv)

            @pl.when(blk == total_blocks - 1)
            def _partial():
                # Only the globally-last block has undefined edge-padding rows.
                row_ids = jax.lax.broadcasted_iota(
                    jnp.int32, (block_rows, _LANE), 0)
                _add(jnp.where(row_ids < valid_rows_last, logv, 0.0))

    if has_overhang_steps:
        pl.when(blk < total_blocks)(_compute)   # skip duplicated trailing steps
    else:
        _compute()


def _pallas_log_sum(x2):
    """sum(log(clip(x2, lo, 1))) over a lane-aligned (rows, 128) slab."""
    rows = x2.shape[0]
    itemsize = jnp.dtype(x2.dtype).itemsize
    kind = _device_kind()

    block_rows_max = max(
        8, (_target_block_bytes(kind) // (_LANE * itemsize)) // 8 * 8)
    block_rows = rows if rows <= block_rows_max else block_rows_max
    acc_rows = 8 if block_rows % 8 == 0 else block_rows

    total_blocks = _ceil_div(rows, block_rows)
    num_cores = min(_tensorcore_count(kind), total_blocks)
    inner_steps = _ceil_div(total_blocks, num_cores)
    last_block = total_blocks - 1

    def x_index_map(c, i):
        # Clamp so no DMA targets a fully out-of-range block; the repeated index
        # lets the pipeline skip the redundant fetch and the in-kernel pl.when
        # skips the redundant compute.
        return (jnp.minimum(c * inner_steps + i, last_block), 0)

    kernel = functools.partial(
        _gloss_kernel, rows=rows, block_rows=block_rows, acc_rows=acc_rows,
        inner_steps=inner_steps, total_blocks=total_blocks, num_cores=num_cores)

    partials = pl.pallas_call(
        kernel,
        out_shape=jax.ShapeDtypeStruct((num_cores, acc_rows, _LANE), jnp.float32),
        grid=(num_cores, inner_steps),
        in_specs=[pl.BlockSpec((block_rows, _LANE), x_index_map)],
        out_specs=pl.BlockSpec((None, acc_rows, _LANE), lambda c, i: (c, 0, 0)),
        compiler_params=pltpu.CompilerParams(
            dimension_semantics=("parallel", "arbitrary")),
    )(x2)
    return jnp.sum(partials)


def gloss(a, logits_gen):
    """C-RNN-GAN generator loss: mean(-log(clamp(logits_gen, EPS, 1.0)))."""
    del a  # unused in the reference forward pass, mirrored from the PyTorch module
    x = logits_gen.reshape(-1)                 # native dtype, no pad copy
    n = x.shape[0]
    aligned = (n // _LANE) * _LANE

    total = jnp.float32(0.0)
    if aligned:
        x_main = x if aligned == n else x[:aligned]
        total = total + _pallas_log_sum(x_main.reshape(aligned // _LANE, _LANE))
    if aligned != n:
        # <=127-element unaligned tail: negligible, handled in plain jnp.
        tail = x[aligned:].astype(jnp.float32)
        total = total + jnp.sum(jnp.log(jnp.clip(tail, _CLAMP_LO, 1.0)))

    return (-total / jnp.float32(n)).astype(jnp.float32)


if __name__ == "__main__":
    key = jax.random.PRNGKey(0)
    k_a, k1, k2, k3 = jax.random.split(key, 4)

    gloss_jit = jax.jit(gloss)

    # C-RNN-GAN: `a` is unused generator-side state; logits_gen are the
    # discriminator's probabilities on generated sequences, shape (batch, seq, 1).
    a = jax.random.normal(k_a, (2, 8, 32), dtype=jnp.float32)

    shapes = [
        (2, 64, 1),    # lane-aligned: whole reduction runs in the Pallas kernel
        (3, 300, 1),   # kernel on the 128-aligned prefix + tiny jnp tail
        (2, 8, 1),     # < 128 elements: tail-only path
    ]
    keys = [k1, k2, k3]

    loss = None
    for shp, kk in zip(shapes, keys):
        logits_gen = jax.random.uniform(kk, shp, dtype=jnp.float32,
                                        minval=0.0, maxval=1.2)  # >1 tests the clamp
        out = jax.block_until_ready(gloss_jit(a, logits_gen))
        ref = jnp.mean(-jnp.log(jnp.clip(logits_gen.astype(jnp.float32),
                                         _CLAMP_LO, 1.0)))
        assert jnp.allclose(out, ref, rtol=1e-5, atol=1e-5), (shp, out, ref)
        if loss is None:
            loss = out

    print("KERNEL_OK")
</pallas_src>

<mosaic_0001>
module attributes {stable_mosaic.version = 11 : i64} {
  func.func @_gloss_kernel(%arg0: i32, %arg1: i32, %arg2: memref<1x128xf32, #tpu.memory_space<vmem>>, %arg3: memref<1x1x128xf32, #tpu.memory_space<vmem>>) attributes {dimension_semantics = [#tpu.dimension_semantics<parallel>, #tpu.dimension_semantics<arbitrary>], iteration_bounds = array<i64: 1, 1>, scalar_prefetch = 0 : i64, scratch_operands = 0 : i64, tpu.core_type = #tpu.core_type<tc>, window_params = [{transform_indices = @transform_0, window_bounds = array<i64: 1, 128>}, {transform_indices = @transform_1, window_bounds = array<i64: 1, 1, 128>}]} {
    %c0_i32 = arith.constant 0 : i32
    %0 = arith.cmpi eq, %arg1, %c0_i32 : i32
    %1 = arith.extui %0 : i1 to i32
    %c0_i32_0 = arith.constant 0 : i32
    %2 = arith.cmpi ne, %1, %c0_i32_0 : i32
    scf.if %2 {
      %cst_9 = arith.constant 0.000000e+00 : f32
      %15 = vector.broadcast %cst_9 : f32 to vector<1x128xf32>
      %c0_10 = arith.constant 0 : index
      %c0_11 = arith.constant 0 : index
      %c0_12 = arith.constant 0 : index
      %16 = vector.load %arg3[%c0_10, %c0_11, %c0_12] : memref<1x1x128xf32, #tpu.memory_space<vmem>>, vector<1x1x128xf32>
      %17 = vector.shape_cast %16 : vector<1x1x128xf32> to vector<1x128xf32>
      %18 = vector.shape_cast %15 : vector<1x128xf32> to vector<1x1x128xf32>
      tpu.vector_store %arg3[%c0_10, %c0_11, %c0_12], %18 {strides = array<i32>} : memref<1x1x128xf32, #tpu.memory_space<vmem>>, vector<1x1x128xf32>,
    } else {
    }
    %c0 = arith.constant 0 : index
    %c0_1 = arith.constant 0 : index
    %3 = vector.load %arg2[%c0, %c0_1] : memref<1x128xf32, #tpu.memory_space<vmem>>, vector<1x128xf32>
    %cst = arith.constant 1.17549435E-38 : f32
    %cst_2 = arith.constant 1.000000e+00 : f32
    %4 = vector.broadcast %cst : f32 to vector<1x128xf32>
    %5 = arith.maximumf %4, %3 : vector<1x128xf32>
    %6 = vector.broadcast %cst_2 : f32 to vector<1x128xf32>
    %7 = arith.minimumf %6, %5 : vector<1x128xf32>
    %8 = math.log %7 : vector<1x128xf32>
    %c0_3 = arith.constant 0 : index
    %c0_4 = arith.constant 0 : index
    %c0_5 = arith.constant 0 : index
    %9 = vector.load %arg3[%c0_3, %c0_4, %c0_5] : memref<1x1x128xf32, #tpu.memory_space<vmem>>, vector<1x1x128xf32>
    %10 = vector.shape_cast %9 : vector<1x1x128xf32> to vector<1x128xf32>
    %11 = arith.addf %10, %8 : vector<1x128xf32>
    %c0_6 = arith.constant 0 : index
    %c0_7 = arith.constant 0 : index
    %c0_8 = arith.constant 0 : index
    %12 = vector.load %arg3[%c0_6, %c0_7, %c0_8] : memref<1x1x128xf32, #tpu.memory_space<vmem>>, vector<1x1x128xf32>
    %13 = vector.shape_cast %12 : vector<1x1x128xf32> to vector<1x128xf32>
    %14 = vector.shape_cast %11 : vector<1x128xf32> to vector<1x1x128xf32>
    tpu.vector_store %arg3[%c0_6, %c0_7, %c0_8], %14 {strides = array<i32>} : memref<1x1x128xf32, #tpu.memory_space<vmem>>, vector<1x1x128xf32>,
    return
  }
  func.func @transform_0(%arg0: i32, %arg1: i32) -> (i32, i32) {
    %c1_i32 = arith.constant 1 : i32
    %0 = arith.muli %arg0, %c1_i32 : i32
    %1 = arith.addi %0, %arg1 : i32
    %c0_i32 = arith.constant 0 : i32
    %2 = arith.minsi %1, %c0_i32 : i32
    %c0_i32_0 = arith.constant 0 : i32
    %c0_i32_1 = arith.constant 0 : i32
    return %2, %c0_i32_0 : i32, i32
  }
  func.func @transform_1(%arg0: i32, %arg1: i32) -> (i32, i32, i32) {
    %c0_i32 = arith.constant 0 : i32
    %c0_i32_0 = arith.constant 0 : i32
    %c0_i32_1 = arith.constant 0 : i32
    return %arg0, %c0_i32, %c0_i32_0 : i32, i32, i32
  }
}

</mosaic_0001>

<llo_original>
// kernel: gloss.1
$region0: #{gloss.1}
  #allocation0 [shape = 'u32[]', space=smem, size = 0x4, offset = 0x4, fixed_abs, tag = 'smem constant byte address 0x4 - core index']
  #allocation1 [shape = 'u32[144,128]{1,0:T(1,128)}', space=vmem, size = 0x12000, scoped, tag = 'internal scratch']
  %s0 = inlined_call_operand.vmem [shape: f32[1,128], index: 0, kind: input, shape index: {}]
  %s1 = inlined_call_operand.vmem [shape: f32[1,1,128], index: 1, kind: output, shape index: {}]
  %s2 = sld [smem:[#allocation0]]
  $region18: #{gloss.1} parent=0
    _
  %s4 = ssub.s32 1, %s2
  %s5 = scalar_select 0, %s4, %s2
  // Predicated region
  $region2: #{gloss.1} parent=0 // pred_check
    _
  $region3: #{gloss.1} parent=0 // pred_check_branch
    %7 = sbr.rel (0) target = $region5
  $region4: #{gloss.1} parent=0 // pred_region
    %s8 = sadd.s32 0, 0
    %p9 = scmp.lt.s32.totalorder %s8, 0
    %s10 = scalar_select %p9, %s8, 0
    %p11 = scmp.lt.s32.totalorder %s10, 0
    %s12 = scalar_select %p11, %s10, 0
    %s13 = scalar_lea.vmem %s0, %s12
    %s14 = sadd.s32 0, 0
    %p15 = scmp.lt.s32.totalorder %s14, 0
    %s16 = scalar_select %p15, %s14, 0
  $region5: #{gloss.1} parent=0 // pred_fallthru
    _
  %s17 = sadd.s32 0, 0
  %p18 = scmp.lt.s32.totalorder %s17, 0
  %s19 = scalar_select %p18, %s17, 0
  %p20 = scmp.lt.s32.totalorder %s19, 0
  %s21 = scalar_select %p20, %s19, 0
  %s22 = scalar_lea.vmem %s0, %s21
  %s23 = sadd.s32 0, 0
  %p24 = scmp.lt.s32.totalorder %s23, 0
  %s25 = scalar_select %p24, %s23, 0
  %p26 = scmp.lt.s32.totalorder %s25, 0
  %s27 = scalar_select %p26, %s25, 0
  %s28 = scalar_lea.vmem %s0, %s27
  %s29 = sadd.s32 0, 0
  %p30 = scmp.lt.s32.totalorder %s29, 0
  %s31 = scalar_select %p30, %s29, 0
  %p32 = scmp.eq.s32.totalorder 0, 0
  // Predicated region
  $region6: #{gloss.1} parent=0 // pred_check
    %p33 = pneg %p32
  $region7: #{gloss.1} parent=0 // pred_check_branch
    %35 = sbr.rel (%p33) target = $region9
  $region8: #{gloss.1} parent=0 // pred_region
    %36 = vst [vmem:[%s1] sm:$0x1] 0.0
  $region9: #{gloss.1} parent=0 // pred_fallthru
    _
  %v37 = vld [vmem:[%s28] sm:$0x1]
  %v38 = vmax.f32 %v37, 1.1754944e-38
  %v39 = vmin.f32 %v38, 1.0
  %v40 = vlog2.pop %v39
  %v41 = vmul.f32 %v40, 0.6931472
  %v42 = vld [vmem:[%s1] sm:$0x1]
  %v43 = vadd.f32 %v42, %v41
  %44 = vst [vmem:[%s1] sm:$0x1] %v43
  // Predicated region
  $region10: #{gloss.1} parent=0 // pred_check
    _
  $region11: #{gloss.1} parent=0 // pred_check_branch
    %46 = sbr.rel (0) target = $region13
  $region12: #{gloss.1} parent=0 // pred_region
    _
  $region13: #{gloss.1} parent=0 // pred_fallthru
    _
  // Predicated region
  $region14: #{gloss.1} parent=0 // pred_check
    _
  $region15: #{gloss.1} parent=0 // pred_check_branch
    %48 = sbr.rel (0) target = $region17
  $region16: #{gloss.1} parent=0 // pred_region
    _
  $region17: #{gloss.1} parent=0 // pred_fallthru
    _

</llo_original>
